<compile_context>
chip_gen: v5e
topology: v5e:2x2
jax: 0.10.0
libtpu: 0.0.40
codegen_flags: <defaults>
</compile_context>

<pallas_src>
import jax
import jax.numpy as jnp
import numpy as np
from jax.experimental import pallas as pl
from jax.experimental.pallas import tpu as pltpu


def _senet_kernel(x_ref, w1e_ref, w2t_ref, e_ref, v_ref, a_ref):
    # x_ref  : (Bt, F*D)  lane-dense batch tile of field embeddings
    # w1e_ref: (F*D, Rp)  = M_avg @ W1^T   (mean folded into the first excitation matmul)
    # w2t_ref: (Rp, F)    = W2^T, zero-padded along Rp
    # e_ref  : (F, F*D)   0/1 expansion matrix (broadcast A back over D via the MXU)
    # v_ref  : (Bt, F*D)  re-weighted embeddings (lane-dense)
    # a_ref  : (Bt, F)    field attention weights
    x = x_ref[...]
    xf = x.astype(jnp.float32)

    h = jnp.dot(xf, w1e_ref[...], preferred_element_type=jnp.float32)      # (Bt, Rp)
    h = jnp.maximum(h, 0.0)
    a = jnp.dot(h, w2t_ref[...], preferred_element_type=jnp.float32)       # (Bt, F)
    a = jnp.maximum(a, 0.0)
    a_ref[...] = a.astype(a_ref.dtype)

    a_exp = jnp.dot(a, e_ref[...], preferred_element_type=jnp.float32)     # (Bt, F*D)
    v_ref[...] = (xf * a_exp).astype(v_ref.dtype)


def senet_forward(feature_emb, w1, w2, *, block_b=None):
    """feature_emb: (B, F, D).
    w1: (R, F) = nn.Linear(F, R, bias=False).weight
    w2: (F, R) = nn.Linear(R, F, bias=False).weight
    Returns (V, A) with V: (B, F, D), A: (B, F)."""
    B, F, D = feature_emb.shape
    R, F_in = w1.shape
    assert F_in == F and w2.shape == (F, R)
    FD = F * D
    assert FD % 128 == 0, "F*D must be a multiple of 128 for the lane-dense layout"

    dtype = feature_emb.dtype
    itemsize = jnp.dtype(dtype).itemsize

    # ---- batch tile selection -------------------------------------------------------------
    if block_b is None:
        block_b = min(1024, B)
        # Prefer >=2 grid steps so the "parallel" batch axis can shard across v7x's 2 TCs.
        if B > 8 and B // block_b < 2:
            block_b = max(8, ((B // 2) // 8) * 8)
    block_b = max(1, min(block_b, B))
    if block_b < B:
        block_b = max(8, (block_b // 8) * 8)          # sublane-aligned partial batch tiles

    # Pad batch to a multiple of the tile (extra rows compute garbage, sliced off below).
    num_blocks = pl.cdiv(B, block_b)
    Bp = num_blocks * block_b

    # ---- offline weight prep (one-time, tiny) ----------------------------------------------
    Rp = max(8, R)                                     # pad R=5 -> 8 for clean vreg layout
    eye = jnp.eye(F, dtype=jnp.float32)
    E = jnp.repeat(eye, D, axis=1)                     # (F, F*D), E[f, f*D+d] = 1
    M_avg = E.T / jnp.float32(D)                       # (F*D, F), block-diagonal 1/D
    w1_eff = M_avg @ w1.T.astype(jnp.float32)          # (F*D, R)
    w1_eff = jnp.pad(w1_eff, ((0, 0), (0, Rp - R)))    # (F*D, Rp)
    w2t = jnp.pad(w2.T.astype(jnp.float32), ((0, Rp - R), (0, 0)))  # (Rp, F)

    # ---- lane-dense input slab ---------------------------------------------------------------
    x2d = feature_emb.reshape(B, FD)                   # free row-major reshape
    if Bp != B:
        x2d = jnp.pad(x2d, ((0, Bp - B), (0, 0)))

    # ---- VMEM budget (generation-safe explicit limit) ----------------------------------------
    block_bytes = itemsize * (2 * block_b * FD + block_b * F)          # x + V + A blocks
    weight_bytes = 4 * (FD * Rp + Rp * F + F * FD)
    vmem_bytes = 2 * block_bytes + 2 * weight_bytes + (2 << 20)        # double-buffer + slack
    vmem_limit = int(min(max(vmem_bytes, 16 << 20), 48 << 20))         # fits v5e/v6e/v7x scopes

    flops = 2 * Bp * FD * Rp + 2 * Bp * Rp * F + 2 * Bp * F * FD + Bp * FD
    bytes_accessed = itemsize * (2 * Bp * FD + Bp * F) + weight_bytes

    v2d, a = pl.pallas_call(
        _senet_kernel,
        out_shape=(
            jax.ShapeDtypeStruct((Bp, FD), dtype),
            jax.ShapeDtypeStruct((Bp, F), dtype),
        ),
        grid=(num_blocks,),
        in_specs=[
            pl.BlockSpec((block_b, FD), lambda b: (b, 0)),   # lane-dense x slab
            pl.BlockSpec((FD, Rp), lambda b: (0, 0)),        # resident in VMEM across steps
            pl.BlockSpec((Rp, F), lambda b: (0, 0)),         # resident in VMEM across steps
            pl.BlockSpec((F, FD), lambda b: (0, 0)),         # resident in VMEM across steps
        ],
        out_specs=[
            pl.BlockSpec((block_b, FD), lambda b: (b, 0)),   # lane-dense V slab
            pl.BlockSpec((block_b, F), lambda b: (b, 0)),
        ],
        compiler_params=pltpu.CompilerParams(
            dimension_semantics=("parallel",),               # batch tiles shard across TCs
            vmem_limit_bytes=vmem_limit,
        ),
        cost_estimate=pl.CostEstimate(
            flops=flops, transcendentals=0, bytes_accessed=bytes_accessed),
    )(x2d, w1_eff, w2t, E)

    v = v2d[:B].reshape(B, F, D)
    a = a[:B]
    return v, a


def senet_ref(feature_emb, w1, w2):
    """Pure-JAX reference mirroring the PyTorch forward."""
    z = jnp.mean(feature_emb, axis=-1)
    a = jax.nn.relu(jax.nn.relu(z @ w1.T) @ w2.T)
    v = feature_emb * a[:, :, None]
    return v, a


if __name__ == "__main__":
    B, F, D = 16, 16, 32
    reduction_ratio = 3
    R = max(1, int(F / reduction_ratio))  # = 5

    key = jax.random.PRNGKey(0)
    k_x, k_w1, k_w2 = jax.random.split(key, 3)
    feature_emb = jax.random.normal(k_x, (B, F, D), dtype=jnp.float32)
    # Deterministic parameter init matching nn.Linear weight shapes (bias=False).
    w1 = jax.random.normal(k_w1, (R, F), dtype=jnp.float32) * (1.0 / np.sqrt(F))  # Linear(F->R)
    w2 = jax.random.normal(k_w2, (F, R), dtype=jnp.float32) * (1.0 / np.sqrt(R))  # Linear(R->F)

    v, a = senet_forward(feature_emb, w1, w2)
    v = jax.block_until_ready(v)
    a = jax.block_until_ready(a)

    v_ref, a_ref = senet_ref(feature_emb, w1, w2)
    np.testing.assert_allclose(np.asarray(a), np.asarray(a_ref), rtol=1e-5, atol=1e-5)
    np.testing.assert_allclose(np.asarray(v), np.asarray(v_ref), rtol=1e-5, atol=1e-5)
    assert v.shape == (B, F, D) and a.shape == (B, F)

    print("KERNEL_OK")
</pallas_src>

<mosaic_0001>
module attributes {stable_mosaic.version = 11 : i64} {
  func.func @_senet_kernel(%arg0: i32, %arg1: memref<8x512xf32, #tpu.memory_space<vmem>>, %arg2: memref<512x8xf32, #tpu.memory_space<vmem>>, %arg3: memref<8x16xf32, #tpu.memory_space<vmem>>, %arg4: memref<16x512xf32, #tpu.memory_space<vmem>>, %arg5: memref<8x512xf32, #tpu.memory_space<vmem>>, %arg6: memref<8x16xf32, #tpu.memory_space<vmem>>) attributes {dimension_semantics = [#tpu.dimension_semantics<parallel>], iteration_bounds = array<i64: 2>, scalar_prefetch = 0 : i64, scratch_operands = 0 : i64, tpu.core_type = #tpu.core_type<tc>, window_params = [{transform_indices = @transform_0, window_bounds = array<i64: 8, 512>}, {pipeline_mode = #tpu.pipeline_mode<synchronous>, transform_indices = @transform_1, window_bounds = array<i64: 512, 8>}, {pipeline_mode = #tpu.pipeline_mode<synchronous>, transform_indices = @transform_2, window_bounds = array<i64: 8, 16>}, {pipeline_mode = #tpu.pipeline_mode<synchronous>, transform_indices = @transform_3, window_bounds = array<i64: 16, 512>}, {transform_indices = @transform_4, window_bounds = array<i64: 8, 512>}, {transform_indices = @transform_5, window_bounds = array<i64: 8, 16>}]} {
    %c0 = arith.constant 0 : index
    %c0_0 = arith.constant 0 : index
    %0 = vector.load %arg1[%c0, %c0_0] : memref<8x512xf32, #tpu.memory_space<vmem>>, vector<8x512xf32>
    %c0_1 = arith.constant 0 : index
    %c0_2 = arith.constant 0 : index
    %1 = vector.load %arg2[%c0_1, %c0_2] : memref<512x8xf32, #tpu.memory_space<vmem>>, vector<512x8xf32>
    %cst = arith.constant dense<0.000000e+00> : vector<8x8xf32>
    %2 = tpu.matmul %0, %1, %cst {dimension_numbers = #tpu.dot_dimension_numbers<[1], [0], [0], [1], [0, 0, 1, 1], [], []>} : vector<8x512xf32>, vector<512x8xf32>, vector<8x8xf32> -> vector<8x8xf32>
    %cst_3 = arith.constant 0.000000e+00 : f32
    %3 = vector.broadcast %cst_3 : f32 to vector<8x8xf32>
    %4 = arith.maximumf %2, %3 : vector<8x8xf32>
    %c0_4 = arith.constant 0 : index
    %c0_5 = arith.constant 0 : index
    %5 = vector.load %arg3[%c0_4, %c0_5] : memref<8x16xf32, #tpu.memory_space<vmem>>, vector<8x16xf32>
    %cst_6 = arith.constant dense<0.000000e+00> : vector<8x16xf32>
    %6 = tpu.matmul %4, %5, %cst_6 {dimension_numbers = #tpu.dot_dimension_numbers<[1], [0], [0], [1], [0, 0, 1, 1], [], []>} : vector<8x8xf32>, vector<8x16xf32>, vector<8x16xf32> -> vector<8x16xf32>
    %cst_7 = arith.constant 0.000000e+00 : f32
    %7 = vector.broadcast %cst_7 : f32 to vector<8x16xf32>
    %8 = arith.maximumf %6, %7 : vector<8x16xf32>
    %c0_8 = arith.constant 0 : index
    %c0_9 = arith.constant 0 : index
    %9 = vector.load %arg6[%c0_8, %c0_9] : memref<8x16xf32, #tpu.memory_space<vmem>>, vector<8x16xf32>
    tpu.vector_store %arg6[%c0_8, %c0_9], %8 {strides = array<i32>} : memref<8x16xf32, #tpu.memory_space<vmem>>, vector<8x16xf32>,
    %c0_10 = arith.constant 0 : index
    %c0_11 = arith.constant 0 : index
    %10 = vector.load %arg4[%c0_10, %c0_11] : memref<16x512xf32, #tpu.memory_space<vmem>>, vector<16x512xf32>
    %cst_12 = arith.constant dense<0.000000e+00> : vector<8x512xf32>
    %11 = tpu.matmul %8, %10, %cst_12 {dimension_numbers = #tpu.dot_dimension_numbers<[1], [0], [0], [1], [0, 0, 1, 1], [], []>} : vector<8x16xf32>, vector<16x512xf32>, vector<8x512xf32> -> vector<8x512xf32>
    %12 = arith.mulf %0, %11 : vector<8x512xf32>
    %c0_13 = arith.constant 0 : index
    %c0_14 = arith.constant 0 : index
    %13 = vector.load %arg5[%c0_13, %c0_14] : memref<8x512xf32, #tpu.memory_space<vmem>>, vector<8x512xf32>
    tpu.vector_store %arg5[%c0_13, %c0_14], %12 {strides = array<i32>} : memref<8x512xf32, #tpu.memory_space<vmem>>, vector<8x512xf32>,
    return
  }
  func.func @transform_0(%arg0: i32) -> (i32, i32) {
    %c0_i32 = arith.constant 0 : i32
    %c0_i32_0 = arith.constant 0 : i32
    return %arg0, %c0_i32 : i32, i32
  }
  func.func @transform_1(%arg0: i32) -> (i32, i32) {
    %c0_i32 = arith.constant 0 : i32
    %c0_i32_0 = arith.constant 0 : i32
    %c0_i32_1 = arith.constant 0 : i32
    return %c0_i32, %c0_i32_0 : i32, i32
  }
  func.func @transform_2(%arg0: i32) -> (i32, i32) {
    %c0_i32 = arith.constant 0 : i32
    %c0_i32_0 = arith.constant 0 : i32
    %c0_i32_1 = arith.constant 0 : i32
    return %c0_i32, %c0_i32_0 : i32, i32
  }
  func.func @transform_3(%arg0: i32) -> (i32, i32) {
    %c0_i32 = arith.constant 0 : i32
    %c0_i32_0 = arith.constant 0 : i32
    %c0_i32_1 = arith.constant 0 : i32
    return %c0_i32, %c0_i32_0 : i32, i32
  }
  func.func @transform_4(%arg0: i32) -> (i32, i32) {
    %c0_i32 = arith.constant 0 : i32
    %c0_i32_0 = arith.constant 0 : i32
    return %arg0, %c0_i32 : i32, i32
  }
  func.func @transform_5(%arg0: i32) -> (i32, i32) {
    %c0_i32 = arith.constant 0 : i32
    %c0_i32_0 = arith.constant 0 : i32
    return %arg0, %c0_i32 : i32, i32
  }
}

</mosaic_0001>

<llo_original>
// kernel: tpu_custom_call.1
$region0: #{tpu_custom_call.1}
  #allocation0 [shape = 'u32[]', space=smem, size = 0x4, offset = 0x4, fixed_abs, tag = 'smem constant byte address 0x4 - core index']
  #allocation1 [shape = 'u32[72,128]{1,0:T(1,128)}', space=vmem, size = 0x9000, scoped, tag = 'internal scratch']
  %s0 = inlined_call_operand.vmem [shape: f32[16,512], index: 0, kind: input, shape index: {}]
  %s1 = inlined_call_operand.vmem [shape: f32[512,8], index: 1, kind: input, shape index: {}]
  %s2 = inlined_call_operand.vmem [shape: f32[8,16], index: 2, kind: input, shape index: {}]
  %s3 = inlined_call_operand.vmem [shape: f32[16,512], index: 3, kind: input, shape index: {}]
  %s4 = inlined_call_operand.hbm [shape: f32[16,512], index: 4, kind: output, shape index: {0}]
  %s5 = inlined_call_operand.hbm [shape: f32[16,16], index: 5, kind: output, shape index: {1}]
  %6 = xla_tuple %s4, %s5
  %s7 = sld [smem:[#allocation0]]
  $region57: #{tpu_custom_call.1} parent=0
    _
  %s9 = ssub.s32 1, %s7
  %s10 = scalar_select 0, %s9, %s7
  $region1: #{tpu_custom_call.1} parent=0
    #allocation2 [shape = 'u8[32768]{0}', space=vmem, size = 0x8000, scoped, tag = 'output window, operand 0']
    #allocation3 [shape = 's32[2]{0}', space=sflag, size = 0x8, scoped, tag = 'scoped memory for tpu_custom_call.1']
    #allocation4 [shape = 'u8[8192]{0}', space=vmem, size = 0x2000, scoped, tag = 'output window, operand 1']
    #allocation5 [shape = 's32[2]{0}', space=sflag, size = 0x8, scoped, tag = 'scoped memory for tpu_custom_call.1']
    %11 = vsyncpa [#allocation3], 0
    %s12 = scalar_lea.sflag [#allocation3], 1
    %13 = vsyncpa %s12, 0
    %14 = vsyncpa [#allocation5], 0
    %s15 = scalar_lea.sflag [#allocation5], 1
    %16 = vsyncpa %s15, 0
    loop: start=0, step=1, limit=4
    $region2: #{tpu_custom_call.1} parent=1 // loop_pre_header
      _
    $region3: #{tpu_custom_call.1} parent=1 // loop_header
      %s18 = sphi 0, %s22
      %p19 = scmp.ge.s32.totalorder %s18, 4
      %s28 = sphi 0, %s30
      %s31 = sphi 0, %s28
      %s32 = sphi 0, %s31
      %s48 = sphi 0, %s32
      %s52 = sphi 0, %s52
      %s54 = sphi 0, %s52
      %s55 = sphi 0, %s54
      %s69 = sphi 0, %s55
      %s73 = sphi 0, %s73
      %s75 = sphi 0, %s73
      %s76 = sphi 0, %s75
      %s90 = sphi 0, %s76
      %s94 = sphi 0, %s94
      %s96 = sphi 0, %s94
      %s97 = sphi 0, %s96
      %s111 = sphi 0, %s97
      %s117 = sphi 0, %s119
      %s120 = sphi 0, %s117
      %s121 = sphi 0, %s120
      %s137 = sphi 0, %s121
      %s143 = sphi 0, %s145
      %s146 = sphi 0, %s143
      %s147 = sphi 0, %s146
      %s163 = sphi 0, %s147
    $region4: #{tpu_custom_call.1} parent=1 // loop_header_branch
      %21 = sbr.rel (%p19) target = $region8
    $region5: #{tpu_custom_call.1} parent=1 // loop_body
      %s23 = ssub.s32 %s18, 1
      %s24 = ssub.s32 %s18, 2
      %s25 = sadd.s32 %s18, 1
      %s26 = ssub.s32 %s18, %s25
      %p27 = scmp.eq.s32.totalorder %s26, 0
      %s29 = sadd.s32 %s28, 1
      %s30 = scalar_select %p27, %s28, %s29
      %p33 = pneg %p27
      %p34 = scmp.eq.s32.totalorder %s18, 1
      %p35 = por %p33, %p34
      %p36 = scmp.ne.s32.totalorder %s28, %s31
      %p37 = scmp.eq.s32.totalorder %s18, 0
      %p38 = por %p36, %p37
      %p39 = scmp.ne.s32.totalorder %s28, %s31
      %p40 = scmp.eq.s32.totalorder %s23, 1
      %p41 = por %p39, %p40
      %p42 = scmp.ne.s32.totalorder %s31, %s32
      %p43 = scmp.eq.s32.totalorder %s23, 0
      %p44 = por %p42, %p43
      %p45 = scmp.ne.s32.totalorder %s31, %s32
      %p46 = scmp.eq.s32.totalorder %s24, 1
      %p47 = por %p45, %p46
      %p49 = scmp.ne.s32.totalorder %s32, %s48
      %p50 = scmp.eq.s32.totalorder %s24, 0
      %p51 = por %p49, %p50
      %s53 = sadd.s32 %s52, 1
      %p56 = scmp.eq.s32.totalorder %s18, 1
      %p57 = scmp.ne.s32.totalorder %s52, %s54
      %p58 = scmp.eq.s32.totalorder %s18, 0
      %p59 = por %p57, %p58
      %p60 = scmp.ne.s32.totalorder %s52, %s54
      %p61 = scmp.eq.s32.totalorder %s23, 1
      %p62 = por %p60, %p61
      %p63 = scmp.ne.s32.totalorder %s54, %s55
      %p64 = scmp.eq.s32.totalorder %s23, 0
      %p65 = por %p63, %p64
      %p66 = scmp.ne.s32.totalorder %s54, %s55
      %p67 = scmp.eq.s32.totalorder %s24, 1
      %p68 = por %p66, %p67
      %p70 = scmp.ne.s32.totalorder %s55, %s69
      %p71 = scmp.eq.s32.totalorder %s24, 0
      %p72 = por %p70, %p71
      %s74 = sadd.s32 %s73, 1
      %p77 = scmp.eq.s32.totalorder %s18, 1
      %p78 = scmp.ne.s32.totalorder %s73, %s75
      %p79 = scmp.eq.s32.totalorder %s18, 0
      %p80 = por %p78, %p79
      %p81 = scmp.ne.s32.totalorder %s73, %s75
      %p82 = scmp.eq.s32.totalorder %s23, 1
      %p83 = por %p81, %p82
      %p84 = scmp.ne.s32.totalorder %s75, %s76
      %p85 = scmp.eq.s32.totalorder %s23, 0
      %p86 = por %p84, %p85
      %p87 = scmp.ne.s32.totalorder %s75, %s76
      %p88 = scmp.eq.s32.totalorder %s24, 1
      %p89 = por %p87, %p88
      %p91 = scmp.ne.s32.totalorder %s76, %s90
      %p92 = scmp.eq.s32.totalorder %s24, 0
      %p93 = por %p91, %p92
      %s95 = sadd.s32 %s94, 1
      %p98 = scmp.eq.s32.totalorder %s18, 1
      %p99 = scmp.ne.s32.totalorder %s94, %s96
      %p100 = scmp.eq.s32.totalorder %s18, 0
      %p101 = por %p99, %p100
      %p102 = scmp.ne.s32.totalorder %s94, %s96
      %p103 = scmp.eq.s32.totalorder %s23, 1
      %p104 = por %p102, %p103
      %p105 = scmp.ne.s32.totalorder %s96, %s97
      %p106 = scmp.eq.s32.totalorder %s23, 0
      %p107 = por %p105, %p106
      %p108 = scmp.ne.s32.totalorder %s96, %s97
      %p109 = scmp.eq.s32.totalorder %s24, 1
      %p110 = por %p108, %p109
      %p112 = scmp.ne.s32.totalorder %s97, %s111
      %p113 = scmp.eq.s32.totalorder %s24, 0
      %p114 = por %p112, %p113
      %s115 = ssub.s32 %s18, %s25
      %p116 = scmp.eq.s32.totalorder %s115, 0
      %s118 = sadd.s32 %s117, 1
      %s119 = scalar_select %p116, %s117, %s118
      %p122 = pneg %p116
      %p123 = scmp.eq.s32.totalorder %s18, 1
      %p124 = por %p122, %p123
      %p125 = scmp.ne.s32.totalorder %s117, %s120
      %p126 = scmp.eq.s32.totalorder %s18, 0
      %p127 = por %p125, %p126
      %p128 = scmp.ne.s32.totalorder %s117, %s120
      %p129 = scmp.eq.s32.totalorder %s23, 1
      %p130 = por %p128, %p129
      %p131 = scmp.ne.s32.totalorder %s120, %s121
      %p132 = scmp.eq.s32.totalorder %s23, 0
      %p133 = por %p131, %p132
      %p134 = scmp.ne.s32.totalorder %s120, %s121
      %p135 = scmp.eq.s32.totalorder %s24, 1
      %p136 = por %p134, %p135
      %p138 = scmp.ne.s32.totalorder %s121, %s137
      %p139 = scmp.eq.s32.totalorder %s24, 0
      %p140 = por %p138, %p139
      %s141 = ssub.s32 %s18, %s25
      %p142 = scmp.eq.s32.totalorder %s141, 0
      %s144 = sadd.s32 %s143, 1
      %s145 = scalar_select %p142, %s143, %s144
      %p148 = pneg %p142
      %p149 = scmp.eq.s32.totalorder %s18, 1
      %p150 = por %p148, %p149
      %p151 = scmp.ne.s32.totalorder %s143, %s146
      %p152 = scmp.eq.s32.totalorder %s18, 0
      %p153 = por %p151, %p152
      %p154 = scmp.ne.s32.totalorder %s143, %s146
      %p155 = scmp.eq.s32.totalorder %s23, 1
      %p156 = por %p154, %p155
      %p157 = scmp.ne.s32.totalorder %s146, %s147
      %p158 = scmp.eq.s32.totalorder %s23, 0
      %p159 = por %p157, %p158
      %p160 = scmp.ne.s32.totalorder %s146, %s147
      %p161 = scmp.eq.s32.totalorder %s24, 1
      %p162 = por %p160, %p161
      %p164 = scmp.ne.s32.totalorder %s147, %s163
      %p165 = scmp.eq.s32.totalorder %s24, 0
      %p166 = por %p164, %p165
      %p167 = scmp.le.s32.totalorder 1, %s18
      %p168 = scmp.lt.s32.totalorder %s18, 3
      %p169 = pnand %p167, %p168
      %p170 = pneg %p169
      // Predicated region
      $region9: #{tpu_custom_call.1} parent=5 // pred_check
        _
      $region10: #{tpu_custom_call.1} parent=5 // pred_check_branch
        %172 = sbr.rel (%p169) target = $region12
      $region11: #{tpu_custom_call.1} parent=5 // pred_region
        %s173 = ssub.s32 %s18, 1
        // Predicated region
        $region13: #{tpu_custom_call.1} parent=11 // pred_check
          %p174 = pneg %p65
        $region14: #{tpu_custom_call.1} parent=11 // pred_check_branch
          %176 = sbr.rel (%p174) target = $region16
        $region15: #{tpu_custom_call.1} parent=11 // pred_region
          _
        $region16: #{tpu_custom_call.1} parent=11 // pred_fallthru
          _
        // Predicated region
        $region17: #{tpu_custom_call.1} parent=11 // pred_check
          %p177 = pneg %p86
        $region18: #{tpu_custom_call.1} parent=11 // pred_check_branch
          %179 = sbr.rel (%p177) target = $region20
        $region19: #{tpu_custom_call.1} parent=11 // pred_region
          _
        $region20: #{tpu_custom_call.1} parent=11 // pred_fallthru
          _
        // Predicated region
        $region21: #{tpu_custom_call.1} parent=11 // pred_check
          %p180 = pneg %p107
        $region22: #{tpu_custom_call.1} parent=11 // pred_check_branch
          %182 = sbr.rel (%p180) target = $region24
        $region23: #{tpu_custom_call.1} parent=11 // pred_region
          _
        $region24: #{tpu_custom_call.1} parent=11 // pred_fallthru
          _
      $region12: #{tpu_custom_call.1} parent=5 // pred_fallthru
        _
      %p183 = scmp.lt.s32.totalorder %s18, 2
      // Predicated region
      $region25: #{tpu_custom_call.1} parent=5 // pred_check
        %p184 = pneg %p183
      $region26: #{tpu_custom_call.1} parent=5 // pred_check_branch
        %186 = sbr.rel (%p184) target = $region28
      $region27: #{tpu_custom_call.1} parent=5 // pred_region
        // Predicated region
        $region29: #{tpu_custom_call.1} parent=27 // pred_check
          %p187 = pneg %p38
        $region30: #{tpu_custom_call.1} parent=27 // pred_check_branch
          %189 = sbr.rel (%p187) target = $region32
        $region31: #{tpu_custom_call.1} parent=27 // pred_region
          %p190 = scmp.lt.s32.totalorder %s18, 1
          %s191 = scalar_select %p190, %s18, 1
          %s192 = smul.addr %s191, 4
          %s193 = smul.addr %s192, 8
          %s194 = scalar_lea.vmem %s0, %s193
        $region32: #{tpu_custom_call.1} parent=27 // pred_fallthru
          _
      $region28: #{tpu_custom_call.1} parent=5 // pred_fallthru
        _
      %p195 = scmp.le.s32.totalorder 1, %s18
      %p196 = scmp.lt.s32.totalorder %s18, 3
      %p197 = pnand %p195, %p196
      %p198 = pneg %p197
      // Predicated region
      $region33: #{tpu_custom_call.1} parent=5 // pred_check
        _
      $region34: #{tpu_custom_call.1} parent=5 // pred_check_branch
        %200 = sbr.rel (%p197) target = $region36
      $region35: #{tpu_custom_call.1} parent=5 // pred_region
        %s201 = ssub.s32 %s18, 1
        %p202 = scmp.lt.s32.totalorder %s23, 1
        %s203 = scalar_select %p202, %s23, 1
        %s204 = smul.addr %s203, 4
        %s205 = smul.addr %s204, 8
        %s206 = scalar_lea.vmem %s0, %s205
        %p207 = pneg %p44
        %p208 = pneg %p41
        %p209 = pneg %p65
        %p210 = pneg %p62
        %p211 = pneg %p86
        %p212 = pneg %p83
        %p213 = pneg %p107
        %p214 = pneg %p104
        %p215 = pneg %p133
        %p216 = pneg %p130
        %s217 = sand.u32 %s120, 1
        %s218 = scalar_lea.sflag [#allocation3], %s217
        %s219 = sand.u32 %s120, 1
        %s220 = smul.addr %s219, 32
        %s221 = scalar_lea.vmem [#allocation2], %s220
        %p222 = pneg %p159
        %p223 = pneg %p156
        %s224 = sand.u32 %s146, 1
        %s225 = scalar_lea.sflag [#allocation5], %s224
        %s226 = sand.u32 %s146, 1
        %s227 = smul.addr %s226, 8
        %s228 = scalar_lea.vmem [#allocation4], %s227
        %p229 = scmp.lt.s32.totalorder %s23, 1
        %s230 = scalar_select %p229, %s23, 1
        %s231 = smul.addr %s230, 4
        %s232 = smul.addr %s231, 8
        %s233 = scalar_lea.vmem %s0, %s232
        %v234 = vld [vmem:[%s233] sm:$0xff]
        %v235 = vld [vmem:[%s233 + $0x8] sm:$0xff]
        %v236 = vld [vmem:[%s233 + $0x10] sm:$0xff]
        %v237 = vld [vmem:[%s233 + $0x18] sm:$0xff]
        %v238 = vld [vmem:[%s1] sm:$0xff]
        %v239 = vld [vmem:[%s1 + $0x8] sm:$0xff]
        %v240 = vld [vmem:[%s1 + $0x10] sm:$0xff]
        %v241 = vld [vmem:[%s1 + $0x18] sm:$0xff]
        %v242 = vld [vmem:[%s1 + $0x20] sm:$0xff]
        %v243 = vld [vmem:[%s1 + $0x28] sm:$0xff]
        %v244 = vld [vmem:[%s1 + $0x30] sm:$0xff]
        %v245 = vld [vmem:[%s1 + $0x38] sm:$0xff]
        %v246 = vld [vmem:[%s1 + $0x40] sm:$0xff]
        %v247 = vld [vmem:[%s1 + $0x48] sm:$0xff]
        %v248 = vld [vmem:[%s1 + $0x50] sm:$0xff]
        %v249 = vld [vmem:[%s1 + $0x58] sm:$0xff]
        %v250 = vld [vmem:[%s1 + $0x60] sm:$0xff]
        %v251 = vld [vmem:[%s1 + $0x68] sm:$0xff]
        %v252 = vld [vmem:[%s1 + $0x70] sm:$0xff]
        %v253 = vld [vmem:[%s1 + $0x78] sm:$0xff]
        %v254 = vld [vmem:[%s1 + $0x80] sm:$0xff]
        %v255 = vld [vmem:[%s1 + $0x88] sm:$0xff]
        %v256 = vld [vmem:[%s1 + $0x90] sm:$0xff]
        %v257 = vld [vmem:[%s1 + $0x98] sm:$0xff]
        %v258 = vld [vmem:[%s1 + $0xa0] sm:$0xff]
        %v259 = vld [vmem:[%s1 + $0xa8] sm:$0xff]
        %v260 = vld [vmem:[%s1 + $0xb0] sm:$0xff]
        %v261 = vld [vmem:[%s1 + $0xb8] sm:$0xff]
        %v262 = vld [vmem:[%s1 + $0xc0] sm:$0xff]
        %v263 = vld [vmem:[%s1 + $0xc8] sm:$0xff]
        %v264 = vld [vmem:[%s1 + $0xd0] sm:$0xff]
        %v265 = vld [vmem:[%s1 + $0xd8] sm:$0xff]
        %v266 = vld [vmem:[%s1 + $0xe0] sm:$0xff]
        %v267 = vld [vmem:[%s1 + $0xe8] sm:$0xff]
        %v268 = vld [vmem:[%s1 + $0xf0] sm:$0xff]
        %v269 = vld [vmem:[%s1 + $0xf8] sm:$0xff]
        %v270 = vld [vmem:[%s1 + $0x100] sm:$0xff]
        %v271 = vld [vmem:[%s1 + $0x108] sm:$0xff]
        %v272 = vld [vmem:[%s1 + $0x110] sm:$0xff]
        %v273 = vld [vmem:[%s1 + $0x118] sm:$0xff]
        %v274 = vld [vmem:[%s1 + $0x120] sm:$0xff]
        %v275 = vld [vmem:[%s1 + $0x128] sm:$0xff]
        %v276 = vld [vmem:[%s1 + $0x130] sm:$0xff]
        %v277 = vld [vmem:[%s1 + $0x138] sm:$0xff]
        %v278 = vld [vmem:[%s1 + $0x140] sm:$0xff]
        %v279 = vld [vmem:[%s1 + $0x148] sm:$0xff]
        %v280 = vld [vmem:[%s1 + $0x150] sm:$0xff]
        %v281 = vld [vmem:[%s1 + $0x158] sm:$0xff]
        %v282 = vld [vmem:[%s1 + $0x160] sm:$0xff]
        %v283 = vld [vmem:[%s1 + $0x168] sm:$0xff]
        %v284 = vld [vmem:[%s1 + $0x170] sm:$0xff]
        %v285 = vld [vmem:[%s1 + $0x178] sm:$0xff]
        %v286 = vld [vmem:[%s1 + $0x180] sm:$0xff]
        %v287 = vld [vmem:[%s1 + $0x188] sm:$0xff]
        %v288 = vld [vmem:[%s1 + $0x190] sm:$0xff]
        %v289 = vld [vmem:[%s1 + $0x198] sm:$0xff]
        %v290 = vld [vmem:[%s1 + $0x1a0] sm:$0xff]
        %v291 = vld [vmem:[%s1 + $0x1a8] sm:$0xff]
        %v292 = vld [vmem:[%s1 + $0x1b0] sm:$0xff]
        %v293 = vld [vmem:[%s1 + $0x1b8] sm:$0xff]
        %v294 = vld [vmem:[%s1 + $0x1c0] sm:$0xff]
        %v295 = vld [vmem:[%s1 + $0x1c8] sm:$0xff]
        %v296 = vld [vmem:[%s1 + $0x1d0] sm:$0xff]
        %v297 = vld [vmem:[%s1 + $0x1d8] sm:$0xff]
        %v298 = vld [vmem:[%s1 + $0x1e0] sm:$0xff]
        %v299 = vld [vmem:[%s1 + $0x1e8] sm:$0xff]
        %v300 = vld [vmem:[%s1 + $0x1f0] sm:$0xff]
        %v301 = vld [vmem:[%s1 + $0x1f8] sm:$0xff]
        %302 = vmatpush.msra.mxu0 %v253
        %303 = vmatpush.msra.mxu0 %v252
        %304 = vmatpush.msra.mxu0 %v251
        %305 = vmatpush.msra.mxu0 %v250
        %306 = vmatpush.msra.mxu0 %v249
        %307 = vmatpush.msra.mxu0 %v248
        %308 = vmatpush.msra.mxu0 %v247
        %309 = vmatpush.msra.mxu0 %v246
        %310 = vmatpush.msra.mxu0 %v245
        %311 = vmatpush.msra.mxu0 %v244
        %312 = vmatpush.msra.mxu0 %v243
        %313 = vmatpush.msra.mxu0 %v242
        %314 = vmatpush.msra.mxu0 %v241
        %315 = vmatpush.msra.mxu0 %v240
        %316 = vmatpush.msra.mxu0 %v239
        %317 = vmatpush.msra.mxu0 %v238
        %318 = vmatmul.f32.gmra.mxu0 %v234
        %v319 = vpop.f32.mrf.mxu0
        %v320 = vadd.f32 0.0, %v319
        %321 = vdwg.mxu0
        %322 = vmatpush.msra.mxu0 %v269
        %323 = vmatpush.msra.mxu0 %v268
        %324 = vmatpush.msra.mxu0 %v267
        %325 = vmatpush.msra.mxu0 %v266
        %326 = vmatpush.msra.mxu0 %v265
        %327 = vmatpush.msra.mxu0 %v264
        %328 = vmatpush.msra.mxu0 %v263
        %329 = vmatpush.msra.mxu0 %v262
        %330 = vmatpush.msra.mxu0 %v261
        %331 = vmatpush.msra.mxu0 %v260
        %332 = vmatpush.msra.mxu0 %v259
        %333 = vmatpush.msra.mxu0 %v258
        %334 = vmatpush.msra.mxu0 %v257
        %335 = vmatpush.msra.mxu0 %v256
        %336 = vmatpush.msra.mxu0 %v255
        %337 = vmatpush.msra.mxu0 %v254
        %338 = vmatmul.f32.gmra.mxu0 %v235
        %v339 = vpop.f32.mrf.mxu0
        %v340 = vadd.f32 %v320, %v339
        %341 = vdwg.mxu0
        %342 = vmatpush.msra.mxu0 %v285
        %343 = vmatpush.msra.mxu0 %v284
        %344 = vmatpush.msra.mxu0 %v283
        %345 = vmatpush.msra.mxu0 %v282
        %346 = vmatpush.msra.mxu0 %v281
        %347 = vmatpush.msra.mxu0 %v280
        %348 = vmatpush.msra.mxu0 %v279
        %349 = vmatpush.msra.mxu0 %v278
        %350 = vmatpush.msra.mxu0 %v277
        %351 = vmatpush.msra.mxu0 %v276
        %352 = vmatpush.msra.mxu0 %v275
        %353 = vmatpush.msra.mxu0 %v274
        %354 = vmatpush.msra.mxu0 %v273
        %355 = vmatpush.msra.mxu0 %v272
        %356 = vmatpush.msra.mxu0 %v271
        %357 = vmatpush.msra.mxu0 %v270
        %358 = vmatmul.f32.gmra.mxu0 %v236
        %v359 = vpop.f32.mrf.mxu0
        %v360 = vadd.f32 %v340, %v359
        %361 = vdwg.mxu0
        %362 = vmatpush.msra.mxu0 %v301
        %363 = vmatpush.msra.mxu0 %v300
        %364 = vmatpush.msra.mxu0 %v299
        %365 = vmatpush.msra.mxu0 %v298
        %366 = vmatpush.msra.mxu0 %v297
        %367 = vmatpush.msra.mxu0 %v296
        %368 = vmatpush.msra.mxu0 %v295
        %369 = vmatpush.msra.mxu0 %v294
        %370 = vmatpush.msra.mxu0 %v293
        %371 = vmatpush.msra.mxu0 %v292
        %372 = vmatpush.msra.mxu0 %v291
        %373 = vmatpush.msra.mxu0 %v290
        %374 = vmatpush.msra.mxu0 %v289
        %375 = vmatpush.msra.mxu0 %v288
        %376 = vmatpush.msra.mxu0 %v287
        %377 = vmatpush.msra.mxu0 %v286
        %378 = vmatmul.f32.gmra.mxu0 %v237
        %v379 = vpop.f32.mrf.mxu0
        %v380 = vadd.f32 %v360, %v379
        %381 = vdwg.mxu0
        %v382 = vmax.f32 %v380, 0.0
        %v383 = vld [vmem:[%s2] sm:$0xff]
        %vm384 = vcmask 64512
        %v386 = vsel %vm384, %v382, 0
        %388 = vmatpush.msra.mxu0 0.0
        %389 = vmatpush.msra.mxu0 0.0
        %390 = vmatpush.msra.mxu0 0.0
        %391 = vmatpush.msra.mxu0 0.0
        %392 = vmatpush.msra.mxu0 0.0
        %393 = vmatpush.msra.mxu0 0.0
        %394 = vmatpush.msra.mxu0 0.0
        %395 = vmatpush.msra.mxu0 0.0
        %396 = vmatpush.msra.mxu0 0.0
        %397 = vmatpush.msra.mxu0 0.0
        %398 = vmatpush.msra.mxu0 0.0
        %399 = vmatpush.msra.mxu0 0.0
        %400 = vmatpush.msra.mxu0 0.0
        %401 = vmatpush.msra.mxu0 0.0
        %402 = vmatpush.msra.mxu0 0.0
        %403 = vmatpush.msra.mxu0 %v383
        %404 = vmatmul.f32.gmra.mxu0 %v386
        %v405 = vpop.f32.mrf.mxu0
        %v406 = vadd.f32 0.0, %v405
        %407 = vdwg.mxu0
        %v408 = vmax.f32 %v406, 0.0
        %vm409 = vcmask 130048
        %410 = vst.msk [vmem:[%s228] sm:$0xff] %vm409, %v408
        %v411 = vld [vmem:[%s3] sm:$0xff]
        %v412 = vld [vmem:[%s3 + $0x8] sm:$0xff]
        %v413 = vld [vmem:[%s3 + $0x10] sm:$0xff]
        %v414 = vld [vmem:[%s3 + $0x18] sm:$0xff]
        %v415 = vld [vmem:[%s3 + $0x20] sm:$0xff]
        %v416 = vld [vmem:[%s3 + $0x28] sm:$0xff]
        %v417 = vld [vmem:[%s3 + $0x30] sm:$0xff]
        %v418 = vld [vmem:[%s3 + $0x38] sm:$0xff]
        %v420 = vsel %vm409, %v408, 0
        %422 = vmatpush.msra.mxu0 0.0
        %423 = vmatpush.msra.mxu0 0.0
        %424 = vmatpush.msra.mxu0 0.0
        %425 = vmatpush.msra.mxu0 0.0
        %426 = vmatpush.msra.mxu0 0.0
        %427 = vmatpush.msra.mxu0 0.0
        %428 = vmatpush.msra.mxu0 0.0
        %429 = vmatpush.msra.mxu0 0.0
        %430 = vmatpush.msra.mxu0 0.0
        %431 = vmatpush.msra.mxu0 0.0
        %432 = vmatpush.msra.mxu0 0.0
        %433 = vmatpush.msra.mxu0 0.0
        %434 = vmatpush.msra.mxu0 0.0
        %435 = vmatpush.msra.mxu0 0.0
        %436 = vmatpush.msra.mxu0 %v415
        %437 = vmatpush.msra.mxu0 %v411
        %438 = vmatmul.f32.gmra.mxu0 %v420
        %v439 = vpop.f32.mrf.mxu0
        %v440 = vadd.f32 0.0, %v439
        %441 = vdwg.mxu0
        %442 = vmatpush.msra.mxu0 0.0
        %443 = vmatpush.msra.mxu0 0.0
        %444 = vmatpush.msra.mxu0 0.0
        %445 = vmatpush.msra.mxu0 0.0
        %446 = vmatpush.msra.mxu0 0.0
        %447 = vmatpush.msra.mxu0 0.0
        %448 = vmatpush.msra.mxu0 0.0
        %449 = vmatpush.msra.mxu0 0.0
        %450 = vmatpush.msra.mxu0 0.0
        %451 = vmatpush.msra.mxu0 0.0
        %452 = vmatpush.msra.mxu0 0.0
        %453 = vmatpush.msra.mxu0 0.0
        %454 = vmatpush.msra.mxu0 0.0
        %455 = vmatpush.msra.mxu0 0.0
        %456 = vmatpush.msra.mxu0 %v416
        %457 = vmatpush.msra.mxu0 %v412
        %458 = vmatmul.f32.gmra.mxu0 %v420
        %v459 = vpop.f32.mrf.mxu0
        %v460 = vadd.f32 0.0, %v459
        %461 = vdwg.mxu0
        %462 = vmatpush.msra.mxu0 0.0
        %463 = vmatpush.msra.mxu0 0.0
        %464 = vmatpush.msra.mxu0 0.0
        %465 = vmatpush.msra.mxu0 0.0
        %466 = vmatpush.msra.mxu0 0.0
        %467 = vmatpush.msra.mxu0 0.0
        %468 = vmatpush.msra.mxu0 0.0
        %469 = vmatpush.msra.mxu0 0.0
        %470 = vmatpush.msra.mxu0 0.0
        %471 = vmatpush.msra.mxu0 0.0
        %472 = vmatpush.msra.mxu0 0.0
        %473 = vmatpush.msra.mxu0 0.0
        %474 = vmatpush.msra.mxu0 0.0
        %475 = vmatpush.msra.mxu0 0.0
        %476 = vmatpush.msra.mxu0 %v417
        %477 = vmatpush.msra.mxu0 %v413
        %478 = vmatmul.f32.gmra.mxu0 %v420
        %v479 = vpop.f32.mrf.mxu0
        %v480 = vadd.f32 0.0, %v479
        %481 = vdwg.mxu0
        %482 = vmatpush.msra.mxu0 0.0
        %483 = vmatpush.msra.mxu0 0.0
        %484 = vmatpush.msra.mxu0 0.0
        %485 = vmatpush.msra.mxu0 0.0
        %486 = vmatpush.msra.mxu0 0.0
        %487 = vmatpush.msra.mxu0 0.0
        %488 = vmatpush.msra.mxu0 0.0
        %489 = vmatpush.msra.mxu0 0.0
        %490 = vmatpush.msra.mxu0 0.0
        %491 = vmatpush.msra.mxu0 0.0
        %492 = vmatpush.msra.mxu0 0.0
        %493 = vmatpush.msra.mxu0 0.0
        %494 = vmatpush.msra.mxu0 0.0
        %495 = vmatpush.msra.mxu0 0.0
        %496 = vmatpush.msra.mxu0 %v418
        %497 = vmatpush.msra.mxu0 %v414
        %498 = vmatmul.f32.gmra.mxu0 %v420
        %v499 = vpop.f32.mrf.mxu0
        %v500 = vadd.f32 0.0, %v499
        %501 = vdwg.mxu0
        %v502 = vmul.f32 %v234, %v440
        %v503 = vmul.f32 %v235, %v460
        %v504 = vmul.f32 %v236, %v480
        %v505 = vmul.f32 %v237, %v500
        %506 = vst [vmem:[%s221] sm:$0xff] %v502
        %507 = vst [vmem:[%s221 + $0x8] sm:$0xff] %v503
        %508 = vst [vmem:[%s221 + $0x10] sm:$0xff] %v504
        %509 = vst [vmem:[%s221 + $0x18] sm:$0xff] %v505
        %s510 = sand.u32 %s120, 1
        %s511 = scalar_lea.sflag [#allocation3], %s510
        %s512 = sand.u32 %s120, 1
        %s513 = smul.addr %s512, 32
        %s514 = scalar_lea.vmem [#allocation2], %s513
        %s515 = sand.u32 %s146, 1
        %s516 = scalar_lea.sflag [#allocation5], %s515
        %s517 = sand.u32 %s146, 1
        %s518 = smul.addr %s517, 8
        %s519 = scalar_lea.vmem [#allocation4], %s518
        // Predicated region
        $region37: #{tpu_custom_call.1} parent=35 // pred_check
          %p520 = pneg %p130
        $region38: #{tpu_custom_call.1} parent=35 // pred_check_branch
          %522 = sbr.rel (%p520) target = $region40
        $region39: #{tpu_custom_call.1} parent=35 // pred_region
          %524 = vsyncadd %s511, 0
          %s525 = smul.addr %s23, 4
          %s526 = smul.addr %s525, 8
          %s527 = scalar_lea.hbm %s4, %s526
          %s529 = sshll.u32 %s514, 4
          %s530 = int_to_ptr.vmem [resolvable:$true] %s529
          %s531 = sshll.u32 %s527, 4
          %s532 = int_to_ptr.hbm [resolvable:$true] %s531
          %534 = dma.vmem_to_hbm [thread:$0]  %s530, 512, %s532, %s511
        $region40: #{tpu_custom_call.1} parent=35 // pred_fallthru
          _
        // Predicated region
        $region41: #{tpu_custom_call.1} parent=35 // pred_check
          %p535 = pneg %p156
        $region42: #{tpu_custom_call.1} parent=35 // pred_check_branch
          %537 = sbr.rel (%p535) target = $region44
        $region43: #{tpu_custom_call.1} parent=35 // pred_region
          %539 = vsyncadd %s516, 0
          %s540 = smul.addr %s23, 8
          %s541 = scalar_lea.hbm %s5, %s540
          %s543 = sshll.u32 %s519, 4
          %s544 = int_to_ptr.vmem [resolvable:$true] %s543
          %s545 = sshll.u32 %s541, 4
          %s546 = int_to_ptr.hbm [resolvable:$true] %s545
          %548 = dma.vmem_to_hbm [thread:$0]  %s544, 128, %s546, %s516
        $region44: #{tpu_custom_call.1} parent=35 // pred_fallthru
          _
      $region36: #{tpu_custom_call.1} parent=5 // pred_fallthru
        _
      %p549 = scmp.le.s32.totalorder 2, %s18
      // Predicated region
      $region45: #{tpu_custom_call.1} parent=5 // pred_check
        %p550 = pneg %p549
      $region46: #{tpu_custom_call.1} parent=5 // pred_check_branch
        %552 = sbr.rel (%p550) target = $region48
      $region47: #{tpu_custom_call.1} parent=5 // pred_region
        %s553 = ssub.s32 %s18, 2
        // Predicated region
        $region49: #{tpu_custom_call.1} parent=47 // pred_check
          %p554 = pneg %p136
        $region50: #{tpu_custom_call.1} parent=47 // pred_check_branch
          %556 = sbr.rel (%p554) target = $region52
        $region51: #{tpu_custom_call.1} parent=47 // pred_region
          %s557 = sand.u32 %s121, 1
          %s558 = scalar_lea.sflag [#allocation3], %s557
          %s559 = sand.u32 %s121, 1
          %s560 = smul.addr %s559, 32
          %s561 = scalar_lea.vmem [#allocation2], %s560
          %563 = dma.done %s558, 512
        $region52: #{tpu_custom_call.1} parent=47 // pred_fallthru
          _
        // Predicated region
        $region53: #{tpu_custom_call.1} parent=47 // pred_check
          %p564 = pneg %p162
        $region54: #{tpu_custom_call.1} parent=47 // pred_check_branch
          %566 = sbr.rel (%p564) target = $region56
        $region55: #{tpu_custom_call.1} parent=47 // pred_region
          %s567 = sand.u32 %s147, 1
          %s568 = scalar_lea.sflag [#allocation5], %s567
          %s569 = sand.u32 %s147, 1
          %s570 = smul.addr %s569, 8
          %s571 = scalar_lea.vmem [#allocation4], %s570
          %573 = dma.done %s568, 128
        $region56: #{tpu_custom_call.1} parent=47 // pred_fallthru
          _
      $region48: #{tpu_custom_call.1} parent=5 // pred_fallthru
        _
    $region6: #{tpu_custom_call.1} parent=1 // loop_footer
      %s22 = sadd.s32 1, %s18
    $region7: #{tpu_custom_call.1} parent=1 // loop_footer_branch
      %17 = sbr.rel target = $region3
    $region8: #{tpu_custom_call.1} parent=1 // loop_exit
      _
    %574 = vsyncpa [#allocation3], 1
    %s575 = scalar_lea.sflag [#allocation3], 1
    %576 = vsyncpa %s575, 1
    %577 = vsyncpa [#allocation5], 1
    %s578 = scalar_lea.sflag [#allocation5], 1
    %579 = vsyncpa %s578, 1

</llo_original>
